<compile_context>
chip_gen: v5e
topology: v5e:2x2
jax: 0.10.0
libtpu: 0.0.40
codegen_flags: <defaults>
</compile_context>

<pallas_src>
import functools
import math

import jax
import jax.numpy as jnp
from jax.experimental import pallas as pl
from jax.experimental.pallas import tpu as pltpu


# ---------------------------------------------------------------------------
# Host-side parameter preparation (run once per model, not per forward call).
# ---------------------------------------------------------------------------

def _sinusoid_rope_tables(max_position, d_hid):
    """cos_position / sin_position exactly as RoPEPositionEncoding builds them."""
    position = jnp.arange(max_position, dtype=jnp.float32)[:, None]
    div_term = jnp.exp(jnp.arange(0, d_hid, 2, dtype=jnp.float32)
                       * (-math.log(10000.0) / d_hid))
    sin_half = jnp.sin(position * div_term)          # embeddings_table[:, 0::2]
    cos_half = jnp.cos(position * div_term)          # embeddings_table[:, 1::2]
    cos_position = jnp.repeat(cos_half, 2, axis=-1)  # repeat_interleave(2, dim=-1)
    sin_position = jnp.repeat(sin_half, 2, axis=-1)
    return cos_position, sin_position


def _largest_divisor_leq(n, cap):
    for d in range(min(n, cap), 0, -1):
        if n % d == 0:
            return d
    return 1


def prepare_global_pointer_params(weight, bias, *, heads, head_size, rope=True,
                                  max_len=512, head_block=None,
                                  compute_dtype=jnp.bfloat16):
    """Fold RoPE + scale into the dense weights and block heads. Call once per model."""
    f32 = jnp.float32
    D = head_size
    H = weight.shape[1]
    assert weight.shape[0] == heads * 2 * D

    # torch Linear layout: weight [heads*2D, H], output feature f = h*2D + j.
    w4 = weight.astype(f32).reshape(heads, 2, D, H)
    wq = jnp.transpose(w4[:, 0], (0, 2, 1))          # [heads, H, D]
    wk = jnp.transpose(w4[:, 1], (0, 2, 1))
    if bias is None:
        bq = jnp.zeros((heads, D), f32)
        bk = jnp.zeros((heads, D), f32)
    else:
        b2 = bias.astype(f32).reshape(heads, 2, D)
        bq, bk = b2[:, 0], b2[:, 1]

    scale = 1.0 / math.sqrt(D)

    if rope:
        assert D % 2 == 0, "head_size must be even for RoPE"
        # Faithful to the reference: seq_dim=-2 means the RoPE table is indexed by
        # the head axis -> per-head constants, hence foldable into the weights.
        assert heads <= max_len, "RoPE table indexed by head axis needs heads <= max_len"
        cos_tab, sin_tab = _sinusoid_rope_tables(max_len, D)
        cos = cos_tab[:heads]                        # [heads, D]
        sin = sin_tab[:heads]
        # rot: q @ rot == stack([-q[..., 1::2], q[..., 0::2]], -1).reshape(q.shape)
        d_idx = jnp.arange(D)
        even = (d_idx % 2) == 0
        rot = jnp.zeros((D, D), f32).at[
            d_idx, jnp.where(even, d_idx + 1, d_idx - 1)
        ].set(jnp.where(even, 1.0, -1.0))
        # R_h = diag(cos_h) + rot @ diag(sin_h)   (q_rope == q @ R_h)
        R = jnp.eye(D, dtype=f32)[None] * cos[:, None, :] + rot[None] * sin[:, None, :]
        wq = jnp.einsum('hkd,hde->hke', wq, R)
        wk = jnp.einsum('hkd,hde->hke', wk, R)
        bq = jnp.einsum('hd,hde->he', bq, R)
        bk = jnp.einsum('hd,hde->he', bk, R)

    # Fold the final / sqrt(D) into the Q side.
    wq = wq * scale
    bq = bq * scale

    # Head blocking: HB heads per grid step -> one [H, HB*D] projection per side.
    # (If batch == 1, pass head_block <= heads//2 so both v7x TensorCores get work.)
    if head_block is None:
        head_block = _largest_divisor_leq(heads, 4)
    assert heads % head_block == 0
    n_hb = heads // head_block

    def _block_w(w):       # [heads, H, D] -> [n_hb, H, HB*D], head-major columns
        return jnp.transpose(w.reshape(n_hb, head_block, H, D),
                             (0, 2, 1, 3)).reshape(n_hb, H, head_block * D)

    def _block_b(b):       # [heads, D] -> [n_hb, 1, HB*D]
        return b.reshape(n_hb, 1, head_block * D)

    return dict(
        wq=_block_w(wq).astype(compute_dtype),
        wk=_block_w(wk).astype(compute_dtype),
        bq=_block_b(bq),                         # biases stay f32 (tiny, exact add)
        bk=_block_b(bk),
        heads=heads, head_size=D, head_block=head_block,
        scale=scale, compute_dtype=compute_dtype,
    )


# ---------------------------------------------------------------------------
# Kernel
# ---------------------------------------------------------------------------

def _global_pointer_kernel(xq_ref, xf_ref, wq_ref, wk_ref, bq_ref, bk_ref, *rest,
                           head_block, head_size, tril_mask, has_mask, tril_const):
    """One (batch, head-block, q-row-tile) grid step.

    xq_ref : [1, TQ, H]      hidden-state row tile (for Q)
    xf_ref : [1, L,  H]      full hidden states     (for K, fetched once per batch)
    wq/wk  : [1, H, HB*D]    folded per-head-block projection weights (RoPE+scale in)
    bq/bk  : [1, 1, HB*D]    folded biases (f32)
    [mrow  : [1, TQ, 1], mcol: [1, 1, L]]  optional padding mask
    out_ref: [1, HB, TQ, L]
    k_ref  : [L, HB*D]       scratch, K for the whole sequence (persists over qi)
    """
    if has_mask:
        mrow_ref, mcol_ref, out_ref, k_ref = rest
    else:
        out_ref, k_ref = rest

    qi = pl.program_id(2)
    HB, D = head_block, head_size

    # K projection for the whole (padded) sequence -- once per (batch, head block).
    @pl.when(qi == 0)
    def _():
        k_full = jnp.dot(xf_ref[0], wk_ref[0], preferred_element_type=jnp.float32)
        k_ref[...] = (k_full + bk_ref[0]).astype(k_ref.dtype)

    # Q projection for this row tile (RoPE and 1/sqrt(D) already folded into wq/bq).
    q = jnp.dot(xq_ref[0], wq_ref[0], preferred_element_type=jnp.float32) + bq_ref[0]
    q = q.astype(k_ref.dtype)                    # MXU operands in compute dtype
    k = k_ref[...]

    TQ = q.shape[0]
    L = k.shape[0]

    if has_mask:
        # Single fused validity mask: [TQ,1] & [1,L] -> [TQ,L] (one select per head).
        valid = (mrow_ref[0] != 0.0) & (mcol_ref[0] != 0.0)
    if tril_mask:
        row = qi * TQ + jax.lax.broadcasted_iota(jnp.int32, (TQ, 1), 0)
        col = jax.lax.broadcasted_iota(jnp.int32, (1, L), 1)
        tril_bias = jnp.where(row > col, jnp.float32(tril_const), jnp.float32(0.0))

    for h in range(HB):                          # static, small (HB <= 4)
        qh = q[:, h * D:(h + 1) * D]
        kh = k[:, h * D:(h + 1) * D]
        # scores[m, n] = sum_d qh[m, d] * kh[n, d]   (already includes 1/sqrt(D))
        s = jax.lax.dot_general(qh, kh, (((1,), (1,)), ((), ())),
                                preferred_element_type=jnp.float32)   # [TQ, L]
        if has_mask:
            s = jnp.where(valid, s, -jnp.inf)
        if tril_mask:
            s = s - tril_bias
        out_ref[0, h] = s.astype(out_ref.dtype)


# ---------------------------------------------------------------------------
# Forward wrappers
# ---------------------------------------------------------------------------

def global_pointer_apply(params, inputs, mask=None, *, tril_mask=True,
                         out_dtype=jnp.float32, q_tile=None):
    """inputs [B, L, H] -> logits [B, heads, L, L] (same semantics as the torch module).

    out_dtype=jnp.bfloat16 halves HBM writeback (recommended on v5e/v6e if the
    consumer tolerates it).
    """
    heads = params['heads']
    D = params['head_size']
    HB = params['head_block']
    n_hb = heads // HB
    cdt = params['compute_dtype']
    scale = params['scale']

    B, L, H = inputs.shape
    assert params['wq'].shape[1] == H

    # Pad L for clean sublane layout (and lane-dense output columns at larger L).
    if L > 512:
        L_pad = ((L + 127) // 128) * 128
    else:
        L_pad = max(((L + 7) // 8) * 8, 8)
    x = inputs.astype(cdt)
    if L_pad != L:
        x = jnp.pad(x, ((0, 0), (0, L_pad - L), (0, 0)))

    # Query-row tiling so the [TQ, L] score tiles / out block fit VMEM (v7x: 64 MiB).
    out_bytes = jnp.dtype(out_dtype).itemsize
    if q_tile is None:
        q_tile = L_pad
        if L_pad > 512:
            for cand in (512, 256, 128):
                if L_pad % cand == 0 and 2 * HB * cand * L_pad * out_bytes <= 32 * 2**20:
                    q_tile = cand
                    break
            else:
                q_tile = 128
    assert L_pad % q_tile == 0
    n_qt = L_pad // q_tile
    # TODO(synk): for very long L (>~16k) also tile the key axis (extra grid dim) so
    # the full-x block and the K scratch stop growing linearly with L.

    has_mask = mask is not None
    tril_const = 1e12 * scale      # reference subtracts 1e12 *before* dividing by sqrt(D)

    in_specs = [
        pl.BlockSpec((1, q_tile, H), lambda b, hb, qi: (b, qi, 0)),   # x row tile (Q)
        pl.BlockSpec((1, L_pad, H), lambda b, hb, qi: (b, 0, 0)),     # full x (K)
        pl.BlockSpec((1, H, HB * D), lambda b, hb, qi: (hb, 0, 0)),   # Wq_eff block
        pl.BlockSpec((1, H, HB * D), lambda b, hb, qi: (hb, 0, 0)),   # Wk_eff block
        pl.BlockSpec((1, 1, HB * D), lambda b, hb, qi: (hb, 0, 0)),   # bq_eff
        pl.BlockSpec((1, 1, HB * D), lambda b, hb, qi: (hb, 0, 0)),   # bk_eff
    ]
    args = [x, x, params['wq'], params['wk'], params['bq'], params['bk']]
    if has_mask:
        m = mask.astype(jnp.float32)
        if L_pad != L:
            m = jnp.pad(m, ((0, 0), (0, L_pad - L)))
        args += [m.reshape(B, L_pad, 1), m.reshape(B, 1, L_pad)]
        in_specs += [
            pl.BlockSpec((1, q_tile, 1), lambda b, hb, qi: (b, qi, 0)),
            pl.BlockSpec((1, 1, L_pad), lambda b, hb, qi: (b, 0, 0)),
        ]

    kernel = functools.partial(
        _global_pointer_kernel, head_block=HB, head_size=D,
        tril_mask=tril_mask, has_mask=has_mask, tril_const=tril_const)

    # Explicit VMEM budget from the actual (double-buffered) blocks + f32 temporaries.
    c_bytes = jnp.dtype(cdt).itemsize
    est = (2 * q_tile * H * c_bytes                 # x row tile
           + 2 * L_pad * H * c_bytes                # full x
           + 4 * H * HB * D * c_bytes               # Wq + Wk blocks
           + 4 * HB * D * 4                         # biases
           + 2 * HB * q_tile * L_pad * out_bytes    # out block
           + L_pad * HB * D * c_bytes               # K scratch
           + (q_tile * HB * D + 4 * q_tile * L_pad) * 4)   # in-kernel temporaries
    if has_mask:
        est += 2 * (q_tile + L_pad) * 4
    vmem_limit = int(min(max(2 * est, 32 * 2**20), 64 * 2**20))

    out = pl.pallas_call(
        kernel,
        out_shape=jax.ShapeDtypeStruct((B, heads, L_pad, L_pad), out_dtype),
        grid_spec=pltpu.PrefetchScalarGridSpec(
            num_scalar_prefetch=0,
            grid=(B, n_hb, n_qt),
            in_specs=in_specs,
            out_specs=pl.BlockSpec((1, HB, q_tile, L_pad),
                                   lambda b, hb, qi: (b, hb, qi, 0)),
            scratch_shapes=[pltpu.VMEM((L_pad, HB * D), cdt)],
        ),
        compiler_params=pltpu.CompilerParams(
            dimension_semantics=("parallel", "parallel", "arbitrary"),
            vmem_limit_bytes=vmem_limit),
    )(*args)

    if L_pad != L:
        out = out[:, :, :L, :L]
    return out


def global_pointer_forward(inputs, weight, bias, *, heads, head_size, rope=True,
                           max_len=512, tril_mask=True, mask=None,
                           compute_dtype=jnp.bfloat16, out_dtype=jnp.float32,
                           head_block=None):
    """Convenience wrapper: prep (should normally be hoisted) + apply."""
    params = prepare_global_pointer_params(
        weight, bias, heads=heads, head_size=head_size, rope=rope,
        max_len=max_len, head_block=head_block, compute_dtype=compute_dtype)
    return global_pointer_apply(params, inputs, mask=mask, tril_mask=tril_mask,
                                out_dtype=out_dtype)


# ---------------------------------------------------------------------------
# Pure-JAX reference (port of the PyTorch module) for verification.
# ---------------------------------------------------------------------------

def _reference_forward(inputs, weight, bias, *, heads, head_size,
                       rope=True, max_len=512, tril_mask=True, mask=None):
    x = inputs.astype(jnp.float32)
    seq = jnp.einsum('blh,oh->blo', x, weight.astype(jnp.float32))
    if bias is not None:
        seq = seq + bias.astype(jnp.float32)
    B, L, _ = seq.shape
    seq = seq.reshape(B, L, heads, 2 * head_size)   # stack(chunk(...)) == reshape
    qw, kw = seq[..., :head_size], seq[..., head_size:]
    if rope:
        cos_tab, sin_tab = _sinusoid_rope_tables(max_len, head_size)

        def _rope(t):
            sl = t.shape[-2]    # default seq_dim=-2 in the torch code -> heads axis
            t2 = jnp.stack([-t[..., 1::2], t[..., 0::2]], axis=-1).reshape(t.shape)
            return t * cos_tab[:sl] + t2 * sin_tab[:sl]

        qw = _rope(qw)
        kw = _rope(kw)
    logits = jnp.einsum('bmhd,bnhd->bhmn', qw, kw)
    if mask is not None:
        m = mask.astype(jnp.float32)
        logits = jnp.where(m[:, None, :, None] == 0, -jnp.inf, logits)
        logits = jnp.where(m[:, None, None, :] == 0, -jnp.inf, logits)
    if tril_mask:
        logits = logits - jnp.tril(jnp.ones_like(logits), -1) * 1e12
    return logits / head_size ** 0.5


if __name__ == "__main__":
    key = jax.random.PRNGKey(0)
    k1, k2, k3, k4 = jax.random.split(key, 4)

    batch, seq_len, hidden = 2, 8, 32
    heads, head_size, max_len = 4, 16, 64

    inputs = jax.random.normal(k1, (batch, seq_len, hidden), dtype=jnp.float32)
    weight = 0.1 * jax.random.normal(
        k2, (heads * head_size * 2, hidden), dtype=jnp.float32)
    bias = 0.1 * jax.random.normal(k3, (heads * head_size * 2,), dtype=jnp.float32)
    mask = (jax.random.uniform(k4, (batch, seq_len)) > 0.3).astype(jnp.float32)

    cfg = dict(heads=heads, head_size=head_size, rope=True, max_len=max_len)

    # --- exact-precision path (f32 MXU operands), params prepared once (hoisted) ---
    params_f32 = prepare_global_pointer_params(weight, bias,
                                               compute_dtype=jnp.float32, **cfg)

    ref = _reference_forward(inputs, weight, bias, tril_mask=True, mask=None, **cfg)
    out = jax.block_until_ready(global_pointer_apply(params_f32, inputs, mask=None))
    assert out.shape == (batch, heads, seq_len, seq_len)
    assert jnp.allclose(out, ref, rtol=1e-4, atol=1e-4)

    ref_m = _reference_forward(inputs, weight, bias, tril_mask=True, mask=mask, **cfg)
    out_m = jax.block_until_ready(global_pointer_apply(params_f32, inputs, mask=mask))
    assert jnp.allclose(out_m, ref_m, rtol=1e-4, atol=1e-4)

    # --- default fast path: bf16 MXU operands, f32 accumulation, f32 output ---
    out_bf = jax.block_until_ready(
        global_pointer_forward(inputs, weight, bias, mask=mask, tril_mask=True, **cfg))
    assert jnp.allclose(out_bf, ref_m, rtol=5e-2, atol=5e-2)

    print("KERNEL_OK")
</pallas_src>

<mosaic_0001>
module attributes {stable_mosaic.version = 11 : i64} {
  func.func @_global_pointer_kernel(%arg0: i32, %arg1: i32, %arg2: i32, %arg3: memref<1x8x32xf32, #tpu.memory_space<vmem>>, %arg4: memref<1x8x32xf32, #tpu.memory_space<vmem>>, %arg5: memref<1x32x64xf32, #tpu.memory_space<vmem>>, %arg6: memref<1x32x64xf32, #tpu.memory_space<vmem>>, %arg7: memref<1x1x64xf32, #tpu.memory_space<vmem>>, %arg8: memref<1x1x64xf32, #tpu.memory_space<vmem>>, %arg9: memref<1x4x8x8xf32, #tpu.memory_space<vmem>>, %arg10: memref<8x64xf32, #tpu.memory_space<vmem>>) attributes {dimension_semantics = [#tpu.dimension_semantics<parallel>, #tpu.dimension_semantics<parallel>, #tpu.dimension_semantics<arbitrary>], iteration_bounds = array<i64: 2, 1, 1>, scalar_prefetch = 0 : i64, scratch_operands = 1 : i64, tpu.core_type = #tpu.core_type<tc>, window_params = [{transform_indices = @transform_0, window_bounds = array<i64: 1, 8, 32>}, {transform_indices = @transform_1, window_bounds = array<i64: 1, 8, 32>}, {transform_indices = @transform_2, window_bounds = array<i64: 1, 32, 64>}, {transform_indices = @transform_3, window_bounds = array<i64: 1, 32, 64>}, {transform_indices = @transform_4, window_bounds = array<i64: 1, 1, 64>}, {transform_indices = @transform_5, window_bounds = array<i64: 1, 1, 64>}, {transform_indices = @transform_6, window_bounds = array<i64: 1, 4, 8, 8>}]} {
    %c0_i32 = arith.constant 0 : i32
    %0 = arith.cmpi eq, %arg2, %c0_i32 : i32
    %1 = arith.extui %0 : i1 to i32
    %c0_i32_0 = arith.constant 0 : i32
    %2 = arith.cmpi ne, %1, %c0_i32_0 : i32
    scf.if %2 {
      %c0_30 = arith.constant 0 : index
      %c0_31 = arith.constant 0 : index
      %c0_32 = arith.constant 0 : index
      %52 = vector.load %arg4[%c0_30, %c0_31, %c0_32] : memref<1x8x32xf32, #tpu.memory_space<vmem>>, vector<1x8x32xf32>
      %53 = vector.shape_cast %52 : vector<1x8x32xf32> to vector<8x32xf32>
      %c0_33 = arith.constant 0 : index
      %c0_34 = arith.constant 0 : index
      %c0_35 = arith.constant 0 : index
      %54 = vector.load %arg6[%c0_33, %c0_34, %c0_35] : memref<1x32x64xf32, #tpu.memory_space<vmem>>, vector<1x32x64xf32>
      %55 = vector.shape_cast %54 : vector<1x32x64xf32> to vector<32x64xf32>
      %cst_36 = arith.constant dense<0.000000e+00> : vector<8x64xf32>
      %56 = tpu.matmul %53, %55, %cst_36 {dimension_numbers = #tpu.dot_dimension_numbers<[1], [0], [0], [1], [0, 0, 1, 1], [], []>} : vector<8x32xf32>, vector<32x64xf32>, vector<8x64xf32> -> vector<8x64xf32>
      %c0_37 = arith.constant 0 : index
      %c0_38 = arith.constant 0 : index
      %c0_39 = arith.constant 0 : index
      %57 = vector.load %arg8[%c0_37, %c0_38, %c0_39] : memref<1x1x64xf32, #tpu.memory_space<vmem>>, vector<1x1x64xf32>
      %58 = vector.shape_cast %57 : vector<1x1x64xf32> to vector<1x64xf32>
      %59 = vector.broadcast %58 : vector<1x64xf32> to vector<8x64xf32>
      %60 = arith.addf %56, %59 : vector<8x64xf32>
      %c0_40 = arith.constant 0 : index
      %c0_41 = arith.constant 0 : index
      %61 = vector.load %arg10[%c0_40, %c0_41] : memref<8x64xf32, #tpu.memory_space<vmem>>, vector<8x64xf32>
      tpu.vector_store %arg10[%c0_40, %c0_41], %60 {strides = array<i32>} : memref<8x64xf32, #tpu.memory_space<vmem>>, vector<8x64xf32>,
    } else {
    }
    %c0 = arith.constant 0 : index
    %c0_1 = arith.constant 0 : index
    %c0_2 = arith.constant 0 : index
    %3 = vector.load %arg3[%c0, %c0_1, %c0_2] : memref<1x8x32xf32, #tpu.memory_space<vmem>>, vector<1x8x32xf32>
    %4 = vector.shape_cast %3 : vector<1x8x32xf32> to vector<8x32xf32>
    %c0_3 = arith.constant 0 : index
    %c0_4 = arith.constant 0 : index
    %c0_5 = arith.constant 0 : index
    %5 = vector.load %arg5[%c0_3, %c0_4, %c0_5] : memref<1x32x64xf32, #tpu.memory_space<vmem>>, vector<1x32x64xf32>
    %6 = vector.shape_cast %5 : vector<1x32x64xf32> to vector<32x64xf32>
    %cst = arith.constant dense<0.000000e+00> : vector<8x64xf32>
    %7 = tpu.matmul %4, %6, %cst {dimension_numbers = #tpu.dot_dimension_numbers<[1], [0], [0], [1], [0, 0, 1, 1], [], []>} : vector<8x32xf32>, vector<32x64xf32>, vector<8x64xf32> -> vector<8x64xf32>
    %c0_6 = arith.constant 0 : index
    %c0_7 = arith.constant 0 : index
    %c0_8 = arith.constant 0 : index
    %8 = vector.load %arg7[%c0_6, %c0_7, %c0_8] : memref<1x1x64xf32, #tpu.memory_space<vmem>>, vector<1x1x64xf32>
    %9 = vector.shape_cast %8 : vector<1x1x64xf32> to vector<1x64xf32>
    %10 = vector.broadcast %9 : vector<1x64xf32> to vector<8x64xf32>
    %11 = arith.addf %7, %10 : vector<8x64xf32>
    %c0_9 = arith.constant 0 : index
    %c0_10 = arith.constant 0 : index
    %12 = vector.load %arg10[%c0_9, %c0_10] : memref<8x64xf32, #tpu.memory_space<vmem>>, vector<8x64xf32>
    %c8_i32 = arith.constant 8 : i32
    %13 = arith.muli %arg2, %c8_i32 : i32
    %14 = tpu.iota {dimensions = array<i32: 0>} : vector<8x1xi32>
    %15 = vector.broadcast %13 : i32 to vector<8x1xi32>
    %16 = arith.addi %15, %14 : vector<8x1xi32>
    %17 = tpu.iota {dimensions = array<i32: 1>} : vector<1x8xi32>
    %18 = vector.broadcast %16 : vector<8x1xi32> to vector<8x8xi32>
    %19 = vector.broadcast %17 : vector<1x8xi32> to vector<8x8xi32>
    %20 = arith.cmpi sgt, %18, %19 : vector<8x8xi32>
    %cst_11 = arith.constant 2.500000e+11 : f32
    %cst_12 = arith.constant 0.000000e+00 : f32
    %21 = vector.broadcast %cst_11 : f32 to vector<8x8xf32>
    %22 = vector.broadcast %cst_12 : f32 to vector<8x8xf32>
    %23 = arith.select %20, %21, %22 : vector<8x8xi1>, vector<8x8xf32>
    %24 = vector.extract_strided_slice %11 {offsets = [0, 0], sizes = [8, 16], strides = [1, 1]} : vector<8x64xf32> to vector<8x16xf32>
    %25 = vector.extract_strided_slice %12 {offsets = [0, 0], sizes = [8, 16], strides = [1, 1]} : vector<8x64xf32> to vector<8x16xf32>
    %cst_13 = arith.constant dense<0.000000e+00> : vector<8x8xf32>
    %26 = tpu.matmul %24, %25, %cst_13 {dimension_numbers = #tpu.dot_dimension_numbers<[1], [1], [0], [0], [0, 0, 1, 0], [], []>} : vector<8x16xf32>, vector<8x16xf32>, vector<8x8xf32> -> vector<8x8xf32>
    %27 = arith.subf %26, %23 : vector<8x8xf32>
    %c0_14 = arith.constant 0 : index
    %c0_15 = arith.constant 0 : index
    %c0_16 = arith.constant 0 : index
    %c0_17 = arith.constant 0 : index
    %28 = vector.load %arg9[%c0_14, %c0_15, %c0_16, %c0_17] : memref<1x4x8x8xf32, #tpu.memory_space<vmem>>, vector<1x1x8x8xf32>
    %29 = vector.shape_cast %28 : vector<1x1x8x8xf32> to vector<8x8xf32>
    %30 = vector.shape_cast %27 : vector<8x8xf32> to vector<1x1x8x8xf32>
    tpu.vector_store %arg9[%c0_14, %c0_15, %c0_16, %c0_17], %30 {strides = array<i32>} : memref<1x4x8x8xf32, #tpu.memory_space<vmem>>, vector<1x1x8x8xf32>,
    %31 = vector.extract_strided_slice %11 {offsets = [0, 16], sizes = [8, 16], strides = [1, 1]} : vector<8x64xf32> to vector<8x16xf32>
    %32 = vector.extract_strided_slice %12 {offsets = [0, 16], sizes = [8, 16], strides = [1, 1]} : vector<8x64xf32> to vector<8x16xf32>
    %cst_18 = arith.constant dense<0.000000e+00> : vector<8x8xf32>
    %33 = tpu.matmul %31, %32, %cst_18 {dimension_numbers = #tpu.dot_dimension_numbers<[1], [1], [0], [0], [0, 0, 1, 0], [], []>} : vector<8x16xf32>, vector<8x16xf32>, vector<8x8xf32> -> vector<8x8xf32>
    %34 = arith.subf %33, %23 : vector<8x8xf32>
    %c0_19 = arith.constant 0 : index
    %c1 = arith.constant 1 : index
    %c0_20 = arith.constant 0 : index
    %c0_21 = arith.constant 0 : index
    %35 = vector.load %arg9[%c0_19, %c1, %c0_20, %c0_21] : memref<1x4x8x8xf32, #tpu.memory_space<vmem>>, vector<1x1x8x8xf32>
    %36 = vector.shape_cast %35 : vector<1x1x8x8xf32> to vector<8x8xf32>
    %37 = vector.shape_cast %34 : vector<8x8xf32> to vector<1x1x8x8xf32>
    tpu.vector_store %arg9[%c0_19, %c1, %c0_20, %c0_21], %37 {strides = array<i32>} : memref<1x4x8x8xf32, #tpu.memory_space<vmem>>, vector<1x1x8x8xf32>,
    %38 = vector.extract_strided_slice %11 {offsets = [0, 32], sizes = [8, 16], strides = [1, 1]} : vector<8x64xf32> to vector<8x16xf32>
    %39 = vector.extract_strided_slice %12 {offsets = [0, 32], sizes = [8, 16], strides = [1, 1]} : vector<8x64xf32> to vector<8x16xf32>
    %cst_22 = arith.constant dense<0.000000e+00> : vector<8x8xf32>
    %40 = tpu.matmul %38, %39, %cst_22 {dimension_numbers = #tpu.dot_dimension_numbers<[1], [1], [0], [0], [0, 0, 1, 0], [], []>} : vector<8x16xf32>, vector<8x16xf32>, vector<8x8xf32> -> vector<8x8xf32>
    %41 = arith.subf %40, %23 : vector<8x8xf32>
    %c0_23 = arith.constant 0 : index
    %c2 = arith.constant 2 : index
    %c0_24 = arith.constant 0 : index
    %c0_25 = arith.constant 0 : index
    %42 = vector.load %arg9[%c0_23, %c2, %c0_24, %c0_25] : memref<1x4x8x8xf32, #tpu.memory_space<vmem>>, vector<1x1x8x8xf32>
    %43 = vector.shape_cast %42 : vector<1x1x8x8xf32> to vector<8x8xf32>
    %44 = vector.shape_cast %41 : vector<8x8xf32> to vector<1x1x8x8xf32>
    tpu.vector_store %arg9[%c0_23, %c2, %c0_24, %c0_25], %44 {strides = array<i32>} : memref<1x4x8x8xf32, #tpu.memory_space<vmem>>, vector<1x1x8x8xf32>,
    %45 = vector.extract_strided_slice %11 {offsets = [0, 48], sizes = [8, 16], strides = [1, 1]} : vector<8x64xf32> to vector<8x16xf32>
    %46 = vector.extract_strided_slice %12 {offsets = [0, 48], sizes = [8, 16], strides = [1, 1]} : vector<8x64xf32> to vector<8x16xf32>
    %cst_26 = arith.constant dense<0.000000e+00> : vector<8x8xf32>
    %47 = tpu.matmul %45, %46, %cst_26 {dimension_numbers = #tpu.dot_dimension_numbers<[1], [1], [0], [0], [0, 0, 1, 0], [], []>} : vector<8x16xf32>, vector<8x16xf32>, vector<8x8xf32> -> vector<8x8xf32>
    %48 = arith.subf %47, %23 : vector<8x8xf32>
    %c0_27 = arith.constant 0 : index
    %c3 = arith.constant 3 : index
    %c0_28 = arith.constant 0 : index
    %c0_29 = arith.constant 0 : index
    %49 = vector.load %arg9[%c0_27, %c3, %c0_28, %c0_29] : memref<1x4x8x8xf32, #tpu.memory_space<vmem>>, vector<1x1x8x8xf32>
    %50 = vector.shape_cast %49 : vector<1x1x8x8xf32> to vector<8x8xf32>
    %51 = vector.shape_cast %48 : vector<8x8xf32> to vector<1x1x8x8xf32>
    tpu.vector_store %arg9[%c0_27, %c3, %c0_28, %c0_29], %51 {strides = array<i32>} : memref<1x4x8x8xf32, #tpu.memory_space<vmem>>, vector<1x1x8x8xf32>,
    return
  }
  func.func @transform_0(%arg0: i32, %arg1: i32, %arg2: i32) -> (i32, i32, i32) {
    %c0_i32 = arith.constant 0 : i32
    %c0_i32_0 = arith.constant 0 : i32
    return %arg0, %arg2, %c0_i32 : i32, i32, i32
  }
  func.func @transform_1(%arg0: i32, %arg1: i32, %arg2: i32) -> (i32, i32, i32) {
    %c0_i32 = arith.constant 0 : i32
    %c0_i32_0 = arith.constant 0 : i32
    %c0_i32_1 = arith.constant 0 : i32
    return %arg0, %c0_i32, %c0_i32_0 : i32, i32, i32
  }
  func.func @transform_2(%arg0: i32, %arg1: i32, %arg2: i32) -> (i32, i32, i32) {
    %c0_i32 = arith.constant 0 : i32
    %c0_i32_0 = arith.constant 0 : i32
    %c0_i32_1 = arith.constant 0 : i32
    return %arg1, %c0_i32, %c0_i32_0 : i32, i32, i32
  }
  func.func @transform_3(%arg0: i32, %arg1: i32, %arg2: i32) -> (i32, i32, i32) {
    %c0_i32 = arith.constant 0 : i32
    %c0_i32_0 = arith.constant 0 : i32
    %c0_i32_1 = arith.constant 0 : i32
    return %arg1, %c0_i32, %c0_i32_0 : i32, i32, i32
  }
  func.func @transform_4(%arg0: i32, %arg1: i32, %arg2: i32) -> (i32, i32, i32) {
    %c0_i32 = arith.constant 0 : i32
    %c0_i32_0 = arith.constant 0 : i32
    %c0_i32_1 = arith.constant 0 : i32
    return %arg1, %c0_i32, %c0_i32_0 : i32, i32, i32
  }
  func.func @transform_5(%arg0: i32, %arg1: i32, %arg2: i32) -> (i32, i32, i32) {
    %c0_i32 = arith.constant 0 : i32
    %c0_i32_0 = arith.constant 0 : i32
    %c0_i32_1 = arith.constant 0 : i32
    return %arg1, %c0_i32, %c0_i32_0 : i32, i32, i32
  }
  func.func @transform_6(%arg0: i32, %arg1: i32, %arg2: i32) -> (i32, i32, i32, i32) {
    %c0_i32 = arith.constant 0 : i32
    %c0_i32_0 = arith.constant 0 : i32
    return %arg0, %arg1, %arg2, %c0_i32 : i32, i32, i32, i32
  }
}

</mosaic_0001>

<llo_original>
// kernel: tpu_custom_call.1
$region0: #{tpu_custom_call.1}
  #allocation0 [shape = 'u32[]', space=smem, size = 0x4, offset = 0x4, fixed_abs, tag = 'smem constant byte address 0x4 - core index']
  #allocation1 [shape = 'u32[72,128]{1,0:T(1,128)}', space=vmem, size = 0x9000, scoped, tag = 'internal scratch']
  #allocation2 [shape = 'f32[8,64]{1,0:T(8,128)}', space=vmem, size = 0x1000, scoped, tag = 'scratch operand']
  %s0 = inlined_call_operand.hbm [shape: f32[2,8,32], index: 0, kind: input, shape index: {}]
  %s1 = inlined_call_operand.hbm [shape: f32[2,8,32], index: 1, kind: input, shape index: {}]
  %s2 = inlined_call_operand.hbm [shape: f32[1,32,64], index: 2, kind: input, shape index: {}]
  %s3 = inlined_call_operand.hbm [shape: f32[1,32,64], index: 3, kind: input, shape index: {}]
  %s4 = inlined_call_operand.vmem [shape: f32[1,1,64], index: 4, kind: input, shape index: {}]
  %s5 = inlined_call_operand.vmem [shape: f32[1,1,64], index: 5, kind: input, shape index: {}]
  %s6 = inlined_call_operand.hbm [shape: f32[2,4,8,8], index: 6, kind: output, shape index: {}]
  %s7 = sld [smem:[#allocation0]]
  $region77: #{tpu_custom_call.1} parent=0
    _
  %s9 = ssub.s32 1, %s7
  %s10 = scalar_select 0, %s9, %s7
  $region1: #{tpu_custom_call.1} parent=0
    #allocation3 [shape = 'u8[8192]{0}', space=vmem, size = 0x2000, scoped, tag = 'input window, operand 0']
    #allocation4 [shape = 's32[2]{0}', space=sflag, size = 0x8, scoped, tag = 'scoped memory for tpu_custom_call.1']
    #allocation5 [shape = 's32[2]{0}', space=sflag, size = 0x8, scoped, tag = 'scoped memory for tpu_custom_call.1']
    #allocation6 [shape = 'u8[8192]{0}', space=vmem, size = 0x2000, scoped, tag = 'input window, operand 1']
    #allocation7 [shape = 's32[2]{0}', space=sflag, size = 0x8, scoped, tag = 'scoped memory for tpu_custom_call.1']
    #allocation8 [shape = 'u8[16384]{0}', space=vmem, size = 0x4000, scoped, tag = 'input window, operand 2, single buffered']
    #allocation9 [shape = 'u8[16384]{0}', space=vmem, size = 0x4000, scoped, tag = 'input window, operand 3, single buffered']
    #allocation10 [shape = 's32[1]{0}', space=sflag, size = 0x4, scoped, tag = 'scoped memory for tpu_custom_call.1']
    #allocation11 [shape = 'u8[32768]{0}', space=vmem, size = 0x8000, scoped, tag = 'output window, operand 0']
    %11 = vsyncpa [#allocation4], 0
    %s12 = scalar_lea.sflag [#allocation4], 1
    %13 = vsyncpa %s12, 0
    %14 = vsyncpa [#allocation7], 0
    %s15 = scalar_lea.sflag [#allocation7], 1
    %16 = vsyncpa %s15, 0
    %17 = vsyncpa [#allocation10], 0
    %18 = vsyncpa [#allocation5], 0
    %s19 = scalar_lea.sflag [#allocation5], 1
    %20 = vsyncpa %s19, 0
    loop: start=0, step=1, limit=4
    $region2: #{tpu_custom_call.1} parent=1 // loop_pre_header
      _
    $region3: #{tpu_custom_call.1} parent=1 // loop_header
      %s22 = sphi 0, %s26
      %p23 = scmp.ge.s32.totalorder %s22, 4
      %s29 = sphi 0, %s48
      %s30 = sphi 0, %s44
      %s31 = sphi 0, %s40
      %s32 = sphi 0, %s29
      %s33 = sphi 0, %s30
      %s34 = sphi 0, %s31
      %s35 = sphi 0, %s32
      %s36 = sphi 0, %s33
      %s37 = sphi 0, %s34
      %s53 = sphi 0, %s55
      %s56 = sphi 0, %s53
      %s57 = sphi 0, %s56
      %s73 = sphi 0, %s57
      %s79 = sphi 0, %s81
      %s82 = sphi 0, %s79
      %s83 = sphi 0, %s82
      %s99 = sphi 0, %s83
      %s105 = sphi 0, %s107
      %s108 = sphi 0, %s105
      %s109 = sphi 0, %s108
      %s125 = sphi 0, %s109
      %s131 = sphi 0, %s133
      %s134 = sphi 0, %s131
      %s135 = sphi 0, %s134
      %s151 = sphi 0, %s135
      %s157 = sphi 0, %s159
      %s160 = sphi 0, %s157
      %s161 = sphi 0, %s160
      %s177 = sphi 0, %s161
      %s183 = sphi 0, %s185
      %s186 = sphi 0, %s183
      %s187 = sphi 0, %s186
      %s203 = sphi 0, %s187
      %s213 = sphi 0, %s215
      %s216 = sphi 0, %s213
      %s217 = sphi 0, %s216
      %s233 = sphi 0, %s217
    $region4: #{tpu_custom_call.1} parent=1 // loop_header_branch
      %25 = sbr.rel (%p23) target = $region8
    $region5: #{tpu_custom_call.1} parent=1 // loop_body
      %s27 = ssub.s32 %s22, 1
      %s28 = ssub.s32 %s22, 2
      %s38 = sadd.s32 1, %s31
      %p39 = scmp.ge.s32.totalorder %s38, 1
      %s40 = scalar_select %p39, 0, %s38
      %s41 = sadd.s32 1, %s30
      %s42 = scalar_select %p39, %s41, %s30
      %p43 = scmp.ge.s32.totalorder %s42, 1
      %s44 = scalar_select %p43, 0, %s42
      %s45 = sadd.s32 1, %s29
      %s46 = scalar_select %p43, %s45, %s29
      %p47 = scmp.ge.s32.totalorder %s46, 2
      %s48 = scalar_select %p47, 0, %s46
      %s49 = ssub.s32 %s29, %s48
      %s50 = ssub.s32 %s31, %s40
      %s51 = sor.u32 %s49, %s50
      %p52 = scmp.eq.s32.totalorder %s51, 0
      %s54 = sadd.s32 %s53, 1
      %s55 = scalar_select %p52, %s53, %s54
      %p58 = pneg %p52
      %p59 = scmp.eq.s32.totalorder %s22, 1
      %p60 = por %p58, %p59
      %p61 = scmp.ne.s32.totalorder %s53, %s56
      %p62 = scmp.eq.s32.totalorder %s22, 0
      %p63 = por %p61, %p62
      %p64 = scmp.ne.s32.totalorder %s53, %s56
      %p65 = scmp.eq.s32.totalorder %s27, 1
      %p66 = por %p64, %p65
      %p67 = scmp.ne.s32.totalorder %s56, %s57
      %p68 = scmp.eq.s32.totalorder %s27, 0
      %p69 = por %p67, %p68
      %p70 = scmp.ne.s32.totalorder %s56, %s57
      %p71 = scmp.eq.s32.totalorder %s28, 1
      %p72 = por %p70, %p71
      %p74 = scmp.ne.s32.totalorder %s57, %s73
      %p75 = scmp.eq.s32.totalorder %s28, 0
      %p76 = por %p74, %p75
      %s77 = ssub.s32 %s29, %s48
      %p78 = scmp.eq.s32.totalorder %s77, 0
      %s80 = sadd.s32 %s79, 1
      %s81 = scalar_select %p78, %s79, %s80
      %p84 = pneg %p78
      %p85 = scmp.eq.s32.totalorder %s22, 1
      %p86 = por %p84, %p85
      %p87 = scmp.ne.s32.totalorder %s79, %s82
      %p88 = scmp.eq.s32.totalorder %s22, 0
      %p89 = por %p87, %p88
      %p90 = scmp.ne.s32.totalorder %s79, %s82
      %p91 = scmp.eq.s32.totalorder %s27, 1
      %p92 = por %p90, %p91
      %p93 = scmp.ne.s32.totalorder %s82, %s83
      %p94 = scmp.eq.s32.totalorder %s27, 0
      %p95 = por %p93, %p94
      %p96 = scmp.ne.s32.totalorder %s82, %s83
      %p97 = scmp.eq.s32.totalorder %s28, 1
      %p98 = por %p96, %p97
      %p100 = scmp.ne.s32.totalorder %s83, %s99
      %p101 = scmp.eq.s32.totalorder %s28, 0
      %p102 = por %p100, %p101
      %s103 = ssub.s32 %s30, %s44
      %p104 = scmp.eq.s32.totalorder %s103, 0
      %s106 = sadd.s32 %s105, 1
      %s107 = scalar_select %p104, %s105, %s106
      %p110 = pneg %p104
      %p111 = scmp.eq.s32.totalorder %s22, 1
      %p112 = por %p110, %p111
      %p113 = scmp.ne.s32.totalorder %s105, %s108
      %p114 = scmp.eq.s32.totalorder %s22, 0
      %p115 = por %p113, %p114
      %p116 = scmp.ne.s32.totalorder %s105, %s108
      %p117 = scmp.eq.s32.totalorder %s27, 1
      %p118 = por %p116, %p117
      %p119 = scmp.ne.s32.totalorder %s108, %s109
      %p120 = scmp.eq.s32.totalorder %s27, 0
      %p121 = por %p119, %p120
      %p122 = scmp.ne.s32.totalorder %s108, %s109
      %p123 = scmp.eq.s32.totalorder %s28, 1
      %p124 = por %p122, %p123
      %p126 = scmp.ne.s32.totalorder %s109, %s125
      %p127 = scmp.eq.s32.totalorder %s28, 0
      %p128 = por %p126, %p127
      %s129 = ssub.s32 %s30, %s44
      %p130 = scmp.eq.s32.totalorder %s129, 0
      %s132 = sadd.s32 %s131, 1
      %s133 = scalar_select %p130, %s131, %s132
      %p136 = pneg %p130
      %p137 = scmp.eq.s32.totalorder %s22, 1
      %p138 = por %p136, %p137
      %p139 = scmp.ne.s32.totalorder %s131, %s134
      %p140 = scmp.eq.s32.totalorder %s22, 0
      %p141 = por %p139, %p140
      %p142 = scmp.ne.s32.totalorder %s131, %s134
      %p143 = scmp.eq.s32.totalorder %s27, 1
      %p144 = por %p142, %p143
      %p145 = scmp.ne.s32.totalorder %s134, %s135
      %p146 = scmp.eq.s32.totalorder %s27, 0
      %p147 = por %p145, %p146
      %p148 = scmp.ne.s32.totalorder %s134, %s135
      %p149 = scmp.eq.s32.totalorder %s28, 1
      %p150 = por %p148, %p149
      %p152 = scmp.ne.s32.totalorder %s135, %s151
      %p153 = scmp.eq.s32.totalorder %s28, 0
      %p154 = por %p152, %p153
      %s155 = ssub.s32 %s30, %s44
      %p156 = scmp.eq.s32.totalorder %s155, 0
      %s158 = sadd.s32 %s157, 1
      %s159 = scalar_select %p156, %s157, %s158
      %p162 = pneg %p156
      %p163 = scmp.eq.s32.totalorder %s22, 1
      %p164 = por %p162, %p163
      %p165 = scmp.ne.s32.totalorder %s157, %s160
      %p166 = scmp.eq.s32.totalorder %s22, 0
      %p167 = por %p165, %p166
      %p168 = scmp.ne.s32.totalorder %s157, %s160
      %p169 = scmp.eq.s32.totalorder %s27, 1
      %p170 = por %p168, %p169
      %p171 = scmp.ne.s32.totalorder %s160, %s161
      %p172 = scmp.eq.s32.totalorder %s27, 0
      %p173 = por %p171, %p172
      %p174 = scmp.ne.s32.totalorder %s160, %s161
      %p175 = scmp.eq.s32.totalorder %s28, 1
      %p176 = por %p174, %p175
      %p178 = scmp.ne.s32.totalorder %s161, %s177
      %p179 = scmp.eq.s32.totalorder %s28, 0
      %p180 = por %p178, %p179
      %s181 = ssub.s32 %s30, %s44
      %p182 = scmp.eq.s32.totalorder %s181, 0
      %s184 = sadd.s32 %s183, 1
      %s185 = scalar_select %p182, %s183, %s184
      %p188 = pneg %p182
      %p189 = scmp.eq.s32.totalorder %s22, 1
      %p190 = por %p188, %p189
      %p191 = scmp.ne.s32.totalorder %s183, %s186
      %p192 = scmp.eq.s32.totalorder %s22, 0
      %p193 = por %p191, %p192
      %p194 = scmp.ne.s32.totalorder %s183, %s186
      %p195 = scmp.eq.s32.totalorder %s27, 1
      %p196 = por %p194, %p195
      %p197 = scmp.ne.s32.totalorder %s186, %s187
      %p198 = scmp.eq.s32.totalorder %s27, 0
      %p199 = por %p197, %p198
      %p200 = scmp.ne.s32.totalorder %s186, %s187
      %p201 = scmp.eq.s32.totalorder %s28, 1
      %p202 = por %p200, %p201
      %p204 = scmp.ne.s32.totalorder %s187, %s203
      %p205 = scmp.eq.s32.totalorder %s28, 0
      %p206 = por %p204, %p205
      %s207 = ssub.s32 %s29, %s48
      %s208 = ssub.s32 %s30, %s44
      %s209 = sor.u32 %s207, %s208
      %s210 = ssub.s32 %s31, %s40
      %s211 = sor.u32 %s209, %s210
      %p212 = scmp.eq.s32.totalorder %s211, 0
      %s214 = sadd.s32 %s213, 1
      %s215 = scalar_select %p212, %s213, %s214
      %p218 = pneg %p212
      %p219 = scmp.eq.s32.totalorder %s22, 1
      %p220 = por %p218, %p219
      %p221 = scmp.ne.s32.totalorder %s213, %s216
      %p222 = scmp.eq.s32.totalorder %s22, 0
      %p223 = por %p221, %p222
      %p224 = scmp.ne.s32.totalorder %s213, %s216
      %p225 = scmp.eq.s32.totalorder %s27, 1
      %p226 = por %p224, %p225
      %p227 = scmp.ne.s32.totalorder %s216, %s217
      %p228 = scmp.eq.s32.totalorder %s27, 0
      %p229 = por %p227, %p228
      %p230 = scmp.ne.s32.totalorder %s216, %s217
      %p231 = scmp.eq.s32.totalorder %s28, 1
      %p232 = por %p230, %p231
      %p234 = scmp.ne.s32.totalorder %s217, %s233
      %p235 = scmp.eq.s32.totalorder %s28, 0
      %p236 = por %p234, %p235
      %p237 = scmp.le.s32.totalorder 1, %s22
      %p238 = scmp.lt.s32.totalorder %s22, 3
      %p239 = pnand %p237, %p238
      %p240 = pneg %p239
      // Predicated region
      $region9: #{tpu_custom_call.1} parent=5 // pred_check
        _
      $region10: #{tpu_custom_call.1} parent=5 // pred_check_branch
        %242 = sbr.rel (%p239) target = $region12
      $region11: #{tpu_custom_call.1} parent=5 // pred_region
        %s243 = ssub.s32 %s22, 1
        // Predicated region
        $region13: #{tpu_custom_call.1} parent=11 // pred_check
          %p244 = pneg %p121
        $region14: #{tpu_custom_call.1} parent=11 // pred_check_branch
          %246 = sbr.rel (%p244) target = $region16
        $region15: #{tpu_custom_call.1} parent=11 // pred_region
          %248 = vsyncadd [#allocation7], 0
          %s249 = smul.addr %s33, 4
          %s250 = smul.addr %s249, 8
          %s251 = scalar_lea.hbm %s2, %s250
          %s252 = sshll.u32 %s251, 4
          %s253 = int_to_ptr.hbm [resolvable:$true] %s252
          %s254 = sshll.u32 [#allocation8], 4
          %s255 = int_to_ptr.vmem [resolvable:$true] %s254
          %260 = dma.hbm_to_vmem [thread:$0]  %s253, 512, %s255, [#allocation7], 128, 128, 8
        $region16: #{tpu_custom_call.1} parent=11 // pred_fallthru
          _
        // Predicated region
        $region17: #{tpu_custom_call.1} parent=11 // pred_check
          %p261 = pneg %p147
        $region18: #{tpu_custom_call.1} parent=11 // pred_check_branch
          %263 = sbr.rel (%p261) target = $region20
        $region19: #{tpu_custom_call.1} parent=11 // pred_region
          %265 = vsyncadd [#allocation10], 0
          %s266 = smul.addr %s33, 4
          %s267 = smul.addr %s266, 8
          %s268 = scalar_lea.hbm %s3, %s267
          %s269 = sshll.u32 %s268, 4
          %s270 = int_to_ptr.hbm [resolvable:$true] %s269
          %s271 = sshll.u32 [#allocation9], 4
          %s272 = int_to_ptr.vmem [resolvable:$true] %s271
          %277 = dma.hbm_to_vmem [thread:$0]  %s270, 512, %s272, [#allocation10], 128, 128, 8
        $region20: #{tpu_custom_call.1} parent=11 // pred_fallthru
          _
        // Predicated region
        $region21: #{tpu_custom_call.1} parent=11 // pred_check
          %p278 = pneg %p173
        $region22: #{tpu_custom_call.1} parent=11 // pred_check_branch
          %280 = sbr.rel (%p278) target = $region24
        $region23: #{tpu_custom_call.1} parent=11 // pred_region
          %p281 = scmp.lt.s32.totalorder %s33, 0
          %s282 = scalar_select %p281, %s33, 0
          %s283 = scalar_lea.vmem %s4, %s282
        $region24: #{tpu_custom_call.1} parent=11 // pred_fallthru
          _
        // Predicated region
        $region25: #{tpu_custom_call.1} parent=11 // pred_check
          %p284 = pneg %p199
        $region26: #{tpu_custom_call.1} parent=11 // pred_check_branch
          %286 = sbr.rel (%p284) target = $region28
        $region27: #{tpu_custom_call.1} parent=11 // pred_region
          %p287 = scmp.lt.s32.totalorder %s33, 0
          %s288 = scalar_select %p287, %s33, 0
          %s289 = scalar_lea.vmem %s5, %s288
        $region28: #{tpu_custom_call.1} parent=11 // pred_fallthru
          _
      $region12: #{tpu_custom_call.1} parent=5 // pred_fallthru
        _
      %p290 = scmp.lt.s32.totalorder %s22, 2
      // Predicated region
      $region29: #{tpu_custom_call.1} parent=5 // pred_check
        %p291 = pneg %p290
      $region30: #{tpu_custom_call.1} parent=5 // pred_check_branch
        %293 = sbr.rel (%p291) target = $region32
      $region31: #{tpu_custom_call.1} parent=5 // pred_region
        // Predicated region
        $region33: #{tpu_custom_call.1} parent=31 // pred_check
          %p294 = pneg %p63
        $region34: #{tpu_custom_call.1} parent=31 // pred_check_branch
          %296 = sbr.rel (%p294) target = $region36
        $region35: #{tpu_custom_call.1} parent=31 // pred_region
          %s297 = sand.u32 %s53, 1
          %s298 = scalar_lea.sflag [#allocation4], %s297
          %s299 = sand.u32 %s53, 1
          %s300 = smul.addr %s299, 8
          %s301 = scalar_lea.vmem [#allocation3], %s300
          %303 = vsyncadd %s298, 0
          %s304 = sadd.s32 %s31, %s29
          %s305 = smul.addr %s304, 8
          %s306 = scalar_lea.hbm %s0, %s305
          %s308 = sshll.u32 %s306, 4
          %s309 = int_to_ptr.hbm [resolvable:$true] %s308
          %s310 = sshll.u32 %s301, 4
          %s311 = int_to_ptr.vmem [resolvable:$true] %s310
          %313 = dma.hbm_to_vmem [thread:$0]  %s309, 128, %s311, %s298
        $region36: #{tpu_custom_call.1} parent=31 // pred_fallthru
          _
        // Predicated region
        $region37: #{tpu_custom_call.1} parent=31 // pred_check
          %p314 = pneg %p89
        $region38: #{tpu_custom_call.1} parent=31 // pred_check_branch
          %316 = sbr.rel (%p314) target = $region40
        $region39: #{tpu_custom_call.1} parent=31 // pred_region
          %s317 = sand.u32 %s22, 1
          %s318 = scalar_lea.sflag [#allocation7], %s317
          %s319 = sand.u32 %s79, 1
          %s320 = smul.addr %s319, 8
          %s321 = scalar_lea.vmem [#allocation6], %s320
          %323 = vsyncadd %s318, 0
          %s324 = smul.addr %s29, 8
          %s325 = scalar_lea.hbm %s1, %s324
          %s327 = sshll.u32 %s325, 4
          %s328 = int_to_ptr.hbm [resolvable:$true] %s327
          %s329 = sshll.u32 %s321, 4
          %s330 = int_to_ptr.vmem [resolvable:$true] %s329
          %332 = dma.hbm_to_vmem [thread:$0]  %s328, 128, %s330, %s318
        $region40: #{tpu_custom_call.1} parent=31 // pred_fallthru
          _
      $region32: #{tpu_custom_call.1} parent=5 // pred_fallthru
        _
      %p333 = scmp.le.s32.totalorder 1, %s22
      %p334 = scmp.lt.s32.totalorder %s22, 3
      %p335 = pnand %p333, %p334
      %p336 = pneg %p335
      // Predicated region
      $region41: #{tpu_custom_call.1} parent=5 // pred_check
        _
      $region42: #{tpu_custom_call.1} parent=5 // pred_check_branch
        %338 = sbr.rel (%p335) target = $region44
      $region43: #{tpu_custom_call.1} parent=5 // pred_region
        %s339 = ssub.s32 %s22, 1
        %s340 = sand.u32 %s56, 1
        %s341 = scalar_lea.sflag [#allocation4], %s340
        %s342 = sand.u32 %s56, 1
        %s343 = smul.addr %s342, 8
        %s344 = scalar_lea.vmem [#allocation3], %s343
        // Predicated region
        $region45: #{tpu_custom_call.1} parent=43 // pred_check
          %p345 = pneg %p69
        $region46: #{tpu_custom_call.1} parent=43 // pred_check_branch
          %347 = sbr.rel (%p345) target = $region48
        $region47: #{tpu_custom_call.1} parent=43 // pred_region
          %349 = dma.done %s341, 128
        $region48: #{tpu_custom_call.1} parent=43 // pred_fallthru
          _
        %s350 = sand.u32 %s27, 1
        %s351 = scalar_lea.sflag [#allocation7], %s350
        %s352 = sand.u32 %s82, 1
        %s353 = smul.addr %s352, 8
        %s354 = scalar_lea.vmem [#allocation6], %s353
        // Predicated region
        $region49: #{tpu_custom_call.1} parent=43 // pred_check
          %p355 = pneg %p95
        $region50: #{tpu_custom_call.1} parent=43 // pred_check_branch
          %357 = sbr.rel (%p355) target = $region52
        $region51: #{tpu_custom_call.1} parent=43 // pred_region
          %359 = dma.done %s351, 128
        $region52: #{tpu_custom_call.1} parent=43 // pred_fallthru
          _
        // Predicated region
        $region53: #{tpu_custom_call.1} parent=43 // pred_check
          %p360 = pneg %p121
        $region54: #{tpu_custom_call.1} parent=43 // pred_check_branch
          %362 = sbr.rel (%p360) target = $region56
        $region55: #{tpu_custom_call.1} parent=43 // pred_region
          %364 = dma.done [#allocation7], 512
        $region56: #{tpu_custom_call.1} parent=43 // pred_fallthru
          _
        // Predicated region
        $region57: #{tpu_custom_call.1} parent=43 // pred_check
          %p365 = pneg %p147
        $region58: #{tpu_custom_call.1} parent=43 // pred_check_branch
          %367 = sbr.rel (%p365) target = $region60
        $region59: #{tpu_custom_call.1} parent=43 // pred_region
          %369 = dma.done [#allocation10], 512
        $region60: #{tpu_custom_call.1} parent=43 // pred_fallthru
          _
        %s370 = sand.u32 %s56, 1
        %s371 = scalar_lea.sflag [#allocation4], %s370
        %s372 = sand.u32 %s56, 1
        %s373 = smul.addr %s372, 8
        %s374 = scalar_lea.vmem [#allocation3], %s373
        %p375 = pneg %p69
        %p376 = pneg %p66
        %s377 = sand.u32 %s27, 1
        %s378 = scalar_lea.sflag [#allocation7], %s377
        %s379 = sand.u32 %s82, 1
        %s380 = smul.addr %s379, 8
        %s381 = scalar_lea.vmem [#allocation6], %s380
        %p382 = pneg %p95
        %p383 = pneg %p92
        %p384 = pneg %p121
        %p385 = pneg %p118
        %p386 = pneg %p147
        %p387 = pneg %p144
        %p388 = scmp.lt.s32.totalorder %s33, 0
        %s389 = scalar_select %p388, %s33, 0
        %s390 = scalar_lea.vmem %s4, %s389
        %p391 = pneg %p173
        %p392 = pneg %p170
        %p393 = scmp.lt.s32.totalorder %s33, 0
        %s394 = scalar_select %p393, %s33, 0
        %s395 = scalar_lea.vmem %s5, %s394
        %p396 = pneg %p199
        %p397 = pneg %p196
        %p398 = pneg %p229
        %p399 = pneg %p226
        %s400 = sand.u32 %s216, 1
        %s401 = scalar_lea.sflag [#allocation5], %s400
        %s402 = sand.u32 %s216, 1
        %s403 = smul.addr %s402, 32
        %s404 = scalar_lea.vmem [#allocation11], %s403
        %p405 = scmp.lt.s32.totalorder %s33, 0
        %s406 = scalar_select %p405, %s33, 0
        %s407 = scalar_lea.vmem %s4, %s406
        %p408 = scmp.lt.s32.totalorder %s33, 0
        %s409 = scalar_select %p408, %s33, 0
        %s410 = scalar_lea.vmem %s5, %s409
        %s411 = smul.u32 4, %s33
        %p412 = scmp.eq.s32.totalorder %s34, 0
        // Predicated region
        $region61: #{tpu_custom_call.1} parent=43 // pred_check
          %p413 = pneg %p412
        $region62: #{tpu_custom_call.1} parent=43 // pred_check_branch
          %415 = sbr.rel (%p413) target = $region64
        $region63: #{tpu_custom_call.1} parent=43 // pred_region
          %v416 = vld [vmem:[%s354] sm:$0xff]
          %v417 = vld [vmem:[#allocation9] sm:$0xff]
          %v418 = vld [vmem:[#allocation9 + $0x8] sm:$0xff]
          %v419 = vld [vmem:[#allocation9 + $0x10] sm:$0xff]
          %v420 = vld [vmem:[#allocation9 + $0x18] sm:$0xff]
          %v421 = vld [vmem:[%s410] sm:$0x1]
          %v423 = vperm.slane %v421, 0
          %vm425 = vcmask 261120
          %v427 = vsel %vm425, %v416, 0
          %429 = vmatpush.msra.mxu0 0.0
          %430 = vmatpush.msra.mxu0 0.0
          %431 = vmatpush.msra.mxu0 0.0
          %432 = vmatpush.msra.mxu0 0.0
          %433 = vmatpush.msra.mxu0 0.0
          %434 = vmatpush.msra.mxu0 0.0
          %435 = vmatpush.msra.mxu0 0.0
          %436 = vmatpush.msra.mxu0 0.0
          %437 = vmatpush.msra.mxu0 0.0
          %438 = vmatpush.msra.mxu0 0.0
          %439 = vmatpush.msra.mxu0 0.0
          %440 = vmatpush.msra.mxu0 0.0
          %441 = vmatpush.msra.mxu0 %v420
          %442 = vmatpush.msra.mxu0 %v419
          %443 = vmatpush.msra.mxu0 %v418
          %444 = vmatpush.msra.mxu0 %v417
          %445 = vmatmul.f32.gmra.mxu0 %v427
          %v446 = vpop.f32.mrf.mxu0
          %v447 = vadd.f32 %v423, %v446
          %448 = vdwg.mxu0
          %vm449 = vcmask 523264
          %450 = vst.msk [vmem:[#allocation2] sm:$0xff] %vm449, %v447
        $region64: #{tpu_custom_call.1} parent=43 // pred_fallthru
          _
        %v451 = vld [vmem:[%s344] sm:$0xff]
        %v452 = vld [vmem:[#allocation8] sm:$0xff]
        %v453 = vld [vmem:[#allocation8 + $0x8] sm:$0xff]
        %v454 = vld [vmem:[#allocation8 + $0x10] sm:$0xff]
        %v455 = vld [vmem:[#allocation8 + $0x18] sm:$0xff]
        %v456 = vld [vmem:[%s407] sm:$0x1]
        %v458 = vperm.slane %v456, 0
        %vm460 = vcmask 261120
        %v462 = vsel %vm460, %v451, 0
        %464 = vmatpush.msra.mxu0 0.0
        %465 = vmatpush.msra.mxu0 0.0
        %466 = vmatpush.msra.mxu0 0.0
        %467 = vmatpush.msra.mxu0 0.0
        %468 = vmatpush.msra.mxu0 0.0
        %469 = vmatpush.msra.mxu0 0.0
        %470 = vmatpush.msra.mxu0 0.0
        %471 = vmatpush.msra.mxu0 0.0
        %472 = vmatpush.msra.mxu0 0.0
        %473 = vmatpush.msra.mxu0 0.0
        %474 = vmatpush.msra.mxu0 0.0
        %475 = vmatpush.msra.mxu0 0.0
        %476 = vmatpush.msra.mxu0 %v455
        %477 = vmatpush.msra.mxu0 %v454
        %478 = vmatpush.msra.mxu0 %v453
        %479 = vmatpush.msra.mxu0 %v452
        %480 = vmatmul.f32.gmra.mxu0 %v462
        %v481 = vpop.f32.mrf.mxu0
        %v482 = vadd.f32 %v458, %v481
        %483 = vdwg.mxu0
        %v484 = vld [vmem:[#allocation2] sm:$0xff]
        %s485 = smul.u32 %s34, 8
        %v486 = vlaneseq
        %v487 = vshrl.u32 %v486, 7
        %v488 = vstv %s485
        %v489 = vadd.s32 %v488, %v487
        %v490 = vlaneseq
        %v491 = vand.u32 %v490, 127
        %vm492 = vcmp.gt.s32.totalorder %v489, %v491
        %v493 = vsel %vm492, 2.5e+11, 0.0
        %vm494 = vcmask 130048
        %v496 = vsel %vm494, %v482, 0
        %v499 = vsel %vm494, %v484, 0
        %501 = vmatpush.xpose.msra.mxu0 0.0
        %502 = vmatpush.xpose.msra.mxu0 0.0
        %503 = vmatpush.xpose.msra.mxu0 0.0
        %504 = vmatpush.xpose.msra.mxu0 0.0
        %505 = vmatpush.xpose.msra.mxu0 0.0
        %506 = vmatpush.xpose.msra.mxu0 0.0
        %507 = vmatpush.xpose.msra.mxu0 0.0
        %508 = vmatpush.xpose.msra.mxu0 0.0
        %509 = vmatpush.xpose.msra.mxu0 0.0
        %510 = vmatpush.xpose.msra.mxu0 0.0
        %511 = vmatpush.xpose.msra.mxu0 0.0
        %512 = vmatpush.xpose.msra.mxu0 0.0
        %513 = vmatpush.xpose.msra.mxu0 0.0
        %514 = vmatpush.xpose.msra.mxu0 0.0
        %515 = vmatpush.xpose.msra.mxu0 0.0
        %516 = vmatpush.xpose.msra.mxu0 %v499
        %517 = vmatmul.f32.gmra.mxu0 %v496
        %v518 = vpop.f32.mrf.mxu0
        %v519 = vadd.f32 0.0, %v518
        %520 = vdwg.mxu0
        %v521 = vsub.f32 %v519, %v493
        %vm522 = vcmask 64512
        %523 = vst.msk [vmem:[%s404] sm:$0xff] %vm522, %v521
        %524 = vrot.lane.b32.xlu0 %v482, 112
        %v525 = vpop.permute.xlu0 %524
        %526 = vrot.lane.b32.xlu0 %v484, 112
        %v527 = vpop.permute.xlu0 %526
        %v528 = vsel %vm494, %v525, 0
        %v530 = vsel %vm494, %v527, 0
        %532 = vmatpush.xpose.msra.mxu0 0.0
        %533 = vmatpush.xpose.msra.mxu0 0.0
        %534 = vmatpush.xpose.msra.mxu0 0.0
        %535 = vmatpush.xpose.msra.mxu0 0.0
        %536 = vmatpush.xpose.msra.mxu0 0.0
        %537 = vmatpush.xpose.msra.mxu0 0.0
        %538 = vmatpush.xpose.msra.mxu0 0.0
        %539 = vmatpush.xpose.msra.mxu0 0.0
        %540 = vmatpush.xpose.msra.mxu0 0.0
        %541 = vmatpush.xpose.msra.mxu0 0.0
        %542 = vmatpush.xpose.msra.mxu0 0.0
        %543 = vmatpush.xpose.msra.mxu0 0.0
        %544 = vmatpush.xpose.msra.mxu0 0.0
        %545 = vmatpush.xpose.msra.mxu0 0.0
        %546 = vmatpush.xpose.msra.mxu0 0.0
        %547 = vmatpush.xpose.msra.mxu0 %v530
        %548 = vmatmul.f32.gmra.mxu0 %v528
        %v549 = vpop.f32.mrf.mxu0
        %v550 = vadd.f32 0.0, %v549
        %551 = vdwg.mxu0
        %v552 = vsub.f32 %v550, %v493
        %s553 = scalar_lea.vmem %s404, 8 [#allocation11]
        %554 = vst.msk [vmem:[%s553] sm:$0xff] %vm522, %v552
        %555 = vrot.lane.b32.xlu0 %v482, 96
        %v556 = vpop.permute.xlu0 %555
        %557 = vrot.lane.b32.xlu0 %v484, 96
        %v558 = vpop.permute.xlu0 %557
        %v559 = vsel %vm494, %v556, 0
        %v561 = vsel %vm494, %v558, 0
        %563 = vmatpush.xpose.msra.mxu0 0.0
        %564 = vmatpush.xpose.msra.mxu0 0.0
        %565 = vmatpush.xpose.msra.mxu0 0.0
        %566 = vmatpush.xpose.msra.mxu0 0.0
        %567 = vmatpush.xpose.msra.mxu0 0.0
        %568 = vmatpush.xpose.msra.mxu0 0.0
        %569 = vmatpush.xpose.msra.mxu0 0.0
        %570 = vmatpush.xpose.msra.mxu0 0.0
        %571 = vmatpush.xpose.msra.mxu0 0.0
        %572 = vmatpush.xpose.msra.mxu0 0.0
        %573 = vmatpush.xpose.msra.mxu0 0.0
        %574 = vmatpush.xpose.msra.mxu0 0.0
        %575 = vmatpush.xpose.msra.mxu0 0.0
        %576 = vmatpush.xpose.msra.mxu0 0.0
        %577 = vmatpush.xpose.msra.mxu0 0.0
        %578 = vmatpush.xpose.msra.mxu0 %v561
        %579 = vmatmul.f32.gmra.mxu0 %v559
        %v580 = vpop.f32.mrf.mxu0
        %v581 = vadd.f32 0.0, %v580
        %582 = vdwg.mxu0
        %v583 = vsub.f32 %v581, %v493
        %s584 = scalar_lea.vmem %s404, 16 [#allocation11]
        %585 = vst.msk [vmem:[%s584] sm:$0xff] %vm522, %v583
        %586 = vrot.lane.b32.xlu0 %v482, 80
        %v587 = vpop.permute.xlu0 %586
        %588 = vrot.lane.b32.xlu0 %v484, 80
        %v589 = vpop.permute.xlu0 %588
        %v590 = vsel %vm494, %v587, 0
        %v592 = vsel %vm494, %v589, 0
        %594 = vmatpush.xpose.msra.mxu0 0.0
        %595 = vmatpush.xpose.msra.mxu0 0.0
        %596 = vmatpush.xpose.msra.mxu0 0.0
        %597 = vmatpush.xpose.msra.mxu0 0.0
        %598 = vmatpush.xpose.msra.mxu0 0.0
        %599 = vmatpush.xpose.msra.mxu0 0.0
        %600 = vmatpush.xpose.msra.mxu0 0.0
        %601 = vmatpush.xpose.msra.mxu0 0.0
        %602 = vmatpush.xpose.msra.mxu0 0.0
        %603 = vmatpush.xpose.msra.mxu0 0.0
        %604 = vmatpush.xpose.msra.mxu0 0.0
        %605 = vmatpush.xpose.msra.mxu0 0.0
        %606 = vmatpush.xpose.msra.mxu0 0.0
        %607 = vmatpush.xpose.msra.mxu0 0.0
        %608 = vmatpush.xpose.msra.mxu0 0.0
        %609 = vmatpush.xpose.msra.mxu0 %v592
        %610 = vmatmul.f32.gmra.mxu0 %v590
        %v611 = vpop.f32.mrf.mxu0
        %v612 = vadd.f32 0.0, %v611
        %613 = vdwg.mxu0
        %v614 = vsub.f32 %v612, %v493
        %s615 = scalar_lea.vmem %s404, 24 [#allocation11]
        %616 = vst.msk [vmem:[%s615] sm:$0xff] %vm522, %v614
        %s617 = sand.u32 %s216, 1
        %s618 = scalar_lea.sflag [#allocation5], %s617
        %s619 = sand.u32 %s216, 1
        %s620 = smul.addr %s619, 32
        %s621 = scalar_lea.vmem [#allocation11], %s620
        // Predicated region
        $region65: #{tpu_custom_call.1} parent=43 // pred_check
          %p622 = pneg %p226
        $region66: #{tpu_custom_call.1} parent=43 // pred_check_branch
          %624 = sbr.rel (%p622) target = $region68
        $region67: #{tpu_custom_call.1} parent=43 // pred_region
          %s625 = smul.u32 4, %s33
          %627 = vsyncadd %s618, 0
          %s628 = sadd.s32 %s34, %s625
          %s629 = smul.addr %s32, 4
          %s630 = sadd.s32 %s628, %s629
          %s631 = smul.addr %s630, 8
          %s632 = scalar_lea.hbm %s6, %s631
          %s633 = sshll.u32 %s621, 4
          %s634 = int_to_ptr.vmem [resolvable:$true] %s633
          %s635 = sshll.u32 %s632, 4
          %s636 = int_to_ptr.hbm [resolvable:$true] %s635
          %641 = dma.vmem_to_hbm [thread:$0]  %s634, 512, %s636, %s618, 128, 128, 8
        $region68: #{tpu_custom_call.1} parent=43 // pred_fallthru
          _
      $region44: #{tpu_custom_call.1} parent=5 // pred_fallthru
        _
      %p642 = scmp.le.s32.totalorder 2, %s22
      // Predicated region
      $region69: #{tpu_custom_call.1} parent=5 // pred_check
        %p643 = pneg %p642
      $region70: #{tpu_custom_call.1} parent=5 // pred_check_branch
        %645 = sbr.rel (%p643) target = $region72
      $region71: #{tpu_custom_call.1} parent=5 // pred_region
        %s646 = ssub.s32 %s22, 2
        // Predicated region
        $region73: #{tpu_custom_call.1} parent=71 // pred_check
          %p647 = pneg %p232
        $region74: #{tpu_custom_call.1} parent=71 // pred_check_branch
          %649 = sbr.rel (%p647) target = $region76
        $region75: #{tpu_custom_call.1} parent=71 // pred_region
          %s650 = sand.u32 %s217, 1
          %s651 = scalar_lea.sflag [#allocation5], %s650
          %s652 = sand.u32 %s217, 1
          %s653 = smul.addr %s652, 32
          %s654 = scalar_lea.vmem [#allocation11], %s653
          %656 = dma.done %s651, 512
        $region76: #{tpu_custom_call.1} parent=71 // pred_fallthru
          _
      $region72: #{tpu_custom_call.1} parent=5 // pred_fallthru
        _
    $region6: #{tpu_custom_call.1} parent=1 // loop_footer
      %s26 = sadd.s32 1, %s22
    $region7: #{tpu_custom_call.1} parent=1 // loop_footer_branch
      %21 = sbr.rel target = $region3
    $region8: #{tpu_custom_call.1} parent=1 // loop_exit
      _
    %657 = vsyncpa [#allocation4], 1
    %s658 = scalar_lea.sflag [#allocation4], 1
    %659 = vsyncpa %s658, 1
    %660 = vsyncpa [#allocation7], 1
    %s661 = scalar_lea.sflag [#allocation7], 1
    %662 = vsyncpa %s661, 1
    %663 = vsyncpa [#allocation10], 1
    %664 = vsyncpa [#allocation5], 1
    %s665 = scalar_lea.sflag [#allocation5], 1
    %666 = vsyncpa %s665, 1

</llo_original>
